<compile_context>
chip_gen: v7x
topology: tpu7x:2x2x1
jax: 0.10.0
libtpu: 0.0.40
codegen_flags: <defaults>
</compile_context>

<pallas_src>
import jax
import jax.numpy as jnp
from jax.experimental import pallas as pl
from jax.experimental.pallas import tpu as pltpu


def critic_kernel(x_ref,
                  w1_ref, b1_ref,
                  w2_ref, b2_ref,
                  w3_ref, b3_ref,
                  w4_ref, b4_ref,
                  out_ref):
    cdt = w1_ref.dtype  # compute dtype for MXU operands (f32 by default)

    # In-kernel cast of the x tile (no-op when cdt == f32).
    x = x_ref[...].astype(cdt)

    # fc1 + relu  (bias add / ReLU stay in f32; cast only before the next dot)
    h = jnp.dot(x, w1_ref[...], preferred_element_type=jnp.float32)
    h = jnp.maximum(h + b1_ref[...], 0.0).astype(cdt)
    # fc2 + relu
    h = jnp.dot(h, w2_ref[...], preferred_element_type=jnp.float32)
    h = jnp.maximum(h + b2_ref[...], 0.0).astype(cdt)
    # fc3 + relu
    h = jnp.dot(h, w3_ref[...], preferred_element_type=jnp.float32)
    h = jnp.maximum(h + b3_ref[...], 0.0).astype(cdt)
    # fc_value (no activation); only the real n_out columns are stored
    out = jnp.dot(h, w4_ref[...], preferred_element_type=jnp.float32)
    out_ref[...] = (out + b4_ref[...]).astype(out_ref.dtype)


def critic_forward(x, params, *, tile_b=2048, compute_dtype=jnp.float32):
    """x: (B, n_in) float32; params: dict of (w1,b1,...,w4,b4).

    Returns (B, n_out) float32.
    """
    B, n_in = x.shape
    n_out = params["w4"].shape[1]

    # ---- batch tiling: 8-aligned tile; pad (f32, zeros) only if ragged -----
    tile_b = max(8, (int(tile_b) // 8) * 8)
    b_min = ((B + 7) // 8) * 8
    tile_b = min(tile_b, b_min)            # don't tile larger than the batch
    n_tiles = pl.cdiv(B, tile_b)
    b_pad = n_tiles * tile_b
    x_in = x if b_pad == B else jnp.pad(x, ((0, b_pad - B), (0, 0)))

    # Weights in compute dtype (no-op when f32); biases stay f32.
    w1 = params["w1"].astype(compute_dtype)
    w2 = params["w2"].astype(compute_dtype)
    w3 = params["w3"].astype(compute_dtype)
    w4 = params["w4"].astype(compute_dtype)
    b1, b2, b3, b4 = params["b1"], params["b2"], params["b3"], params["b4"]

    # Full-block, constant-index specs: DMA'd once, VMEM-resident across tiles
    resident = lambda a: pl.BlockSpec(a.shape, lambda i: (0, 0))

    out = pl.pallas_call(
        critic_kernel,
        out_shape=jax.ShapeDtypeStruct((b_pad, n_out), jnp.float32),
        grid=(n_tiles,),
        in_specs=[
            pl.BlockSpec((tile_b, n_in), lambda i: (i, 0)),   # x (tiled)
            resident(w1), resident(b1),
            resident(w2), resident(b2),
            resident(w3), resident(b3),
            resident(w4), resident(b4),
        ],
        out_specs=pl.BlockSpec((tile_b, n_out), lambda i: (i, 0)),
        compiler_params=pltpu.CompilerParams(
            dimension_semantics=("parallel",)),
    )(x_in, w1, b1, w2, b2, w3, b3, w4, b4)

    return out[:B, :]


def init_params(key, n_in, n_out):
    """Deterministic init mimicking PyTorch Linear's U(-1/sqrt(fan_in), +)."""
    sizes = [(n_in, 64), (64, 32), (32, 16), (16, n_out)]
    params = {}
    for i, (fin, fout) in enumerate(sizes, start=1):
        key, kw, kb = jax.random.split(key, 3)
        bound = 1.0 / jnp.sqrt(jnp.float32(fin))
        params[f"w{i}"] = jax.random.uniform(
            kw, (fin, fout), jnp.float32, -bound, bound)
        params[f"b{i}"] = jax.random.uniform(
            kb, (1, fout), jnp.float32, -bound, bound)
    return params


def reference_forward(x, p, compute_dtype=jnp.float32):
    """Same math as the kernel: compute_dtype operands, f32 accumulation."""
    c = lambda a: a.astype(compute_dtype)
    f32 = jnp.float32
    h = jnp.maximum(
        jnp.dot(c(x), c(p["w1"]), preferred_element_type=f32) + p["b1"], 0.0)
    h = jnp.maximum(
        jnp.dot(c(h), c(p["w2"]), preferred_element_type=f32) + p["b2"], 0.0)
    h = jnp.maximum(
        jnp.dot(c(h), c(p["w3"]), preferred_element_type=f32) + p["b3"], 0.0)
    return jnp.dot(c(h), c(p["w4"]), preferred_element_type=f32) + p["b4"]


if __name__ == "__main__":
    # Pendulum-style critic: state dim 3, value output dim 1.
    # Batch of 256 with tile_b=128 exercises a 2-step pipelined grid while
    # staying tiny; production batches would use the default tile_b=2048.
    B, N_IN, N_OUT = 256, 3, 1

    key = jax.random.PRNGKey(0)
    key, kx = jax.random.split(key)
    x = jax.random.normal(kx, (B, N_IN), jnp.float32)
    params = init_params(key, N_IN, N_OUT)

    out = critic_forward(x, params, tile_b=128)
    out = jax.block_until_ready(out)

    ref = reference_forward(x, params)
    assert out.shape == (B, N_OUT)
    assert jnp.allclose(out, ref, atol=1e-4, rtol=1e-4)

    print("KERNEL_OK")
</pallas_src>

<mosaic_0001>
module attributes {stable_mosaic.version = 11 : i64} {
  func.func @critic_kernel(%arg0: i32, %arg1: memref<128x3xf32, #tpu.memory_space<vmem>>, %arg2: memref<3x64xf32, #tpu.memory_space<vmem>>, %arg3: memref<1x64xf32, #tpu.memory_space<vmem>>, %arg4: memref<64x32xf32, #tpu.memory_space<vmem>>, %arg5: memref<1x32xf32, #tpu.memory_space<vmem>>, %arg6: memref<32x16xf32, #tpu.memory_space<vmem>>, %arg7: memref<1x16xf32, #tpu.memory_space<vmem>>, %arg8: memref<16x1xf32, #tpu.memory_space<vmem>>, %arg9: memref<1x1xf32, #tpu.memory_space<vmem>>, %arg10: memref<128x1xf32, #tpu.memory_space<vmem>>) attributes {dimension_semantics = [#tpu.dimension_semantics<parallel>], iteration_bounds = array<i64: 2>, scalar_prefetch = 0 : i64, scratch_operands = 0 : i64, tpu.core_type = #tpu.core_type<tc>, window_params = [{transform_indices = @transform_0, window_bounds = array<i64: 128, 3>}, {pipeline_mode = #tpu.pipeline_mode<synchronous>, transform_indices = @transform_1, window_bounds = array<i64: 3, 64>}, {pipeline_mode = #tpu.pipeline_mode<synchronous>, transform_indices = @transform_2, window_bounds = array<i64: 1, 64>}, {pipeline_mode = #tpu.pipeline_mode<synchronous>, transform_indices = @transform_3, window_bounds = array<i64: 64, 32>}, {pipeline_mode = #tpu.pipeline_mode<synchronous>, transform_indices = @transform_4, window_bounds = array<i64: 1, 32>}, {pipeline_mode = #tpu.pipeline_mode<synchronous>, transform_indices = @transform_5, window_bounds = array<i64: 32, 16>}, {pipeline_mode = #tpu.pipeline_mode<synchronous>, transform_indices = @transform_6, window_bounds = array<i64: 1, 16>}, {pipeline_mode = #tpu.pipeline_mode<synchronous>, transform_indices = @transform_7, window_bounds = array<i64: 16, 1>}, {pipeline_mode = #tpu.pipeline_mode<synchronous>, transform_indices = @transform_8, window_bounds = array<i64: 1, 1>}, {transform_indices = @transform_9, window_bounds = array<i64: 128, 1>}]} {
    %c0 = arith.constant 0 : index
    %c0_0 = arith.constant 0 : index
    %0 = vector.load %arg1[%c0, %c0_0] : memref<128x3xf32, #tpu.memory_space<vmem>>, vector<128x3xf32>
    %c0_1 = arith.constant 0 : index
    %c0_2 = arith.constant 0 : index
    %1 = vector.load %arg2[%c0_1, %c0_2] : memref<3x64xf32, #tpu.memory_space<vmem>>, vector<3x64xf32>
    %cst = arith.constant dense<0.000000e+00> : vector<128x64xf32>
    %2 = tpu.matmul %0, %1, %cst {dimension_numbers = #tpu.dot_dimension_numbers<[1], [0], [0], [1], [0, 0, 1, 1], [], []>} : vector<128x3xf32>, vector<3x64xf32>, vector<128x64xf32> -> vector<128x64xf32>
    %c0_3 = arith.constant 0 : index
    %c0_4 = arith.constant 0 : index
    %3 = vector.load %arg3[%c0_3, %c0_4] : memref<1x64xf32, #tpu.memory_space<vmem>>, vector<1x64xf32>
    %4 = vector.broadcast %3 : vector<1x64xf32> to vector<128x64xf32>
    %5 = arith.addf %2, %4 : vector<128x64xf32>
    %cst_5 = arith.constant 0.000000e+00 : f32
    %6 = vector.broadcast %cst_5 : f32 to vector<128x64xf32>
    %7 = arith.maximumf %5, %6 : vector<128x64xf32>
    %c0_6 = arith.constant 0 : index
    %c0_7 = arith.constant 0 : index
    %8 = vector.load %arg4[%c0_6, %c0_7] : memref<64x32xf32, #tpu.memory_space<vmem>>, vector<64x32xf32>
    %cst_8 = arith.constant dense<0.000000e+00> : vector<128x32xf32>
    %9 = tpu.matmul %7, %8, %cst_8 {dimension_numbers = #tpu.dot_dimension_numbers<[1], [0], [0], [1], [0, 0, 1, 1], [], []>} : vector<128x64xf32>, vector<64x32xf32>, vector<128x32xf32> -> vector<128x32xf32>
    %c0_9 = arith.constant 0 : index
    %c0_10 = arith.constant 0 : index
    %10 = vector.load %arg5[%c0_9, %c0_10] : memref<1x32xf32, #tpu.memory_space<vmem>>, vector<1x32xf32>
    %11 = vector.broadcast %10 : vector<1x32xf32> to vector<128x32xf32>
    %12 = arith.addf %9, %11 : vector<128x32xf32>
    %cst_11 = arith.constant 0.000000e+00 : f32
    %13 = vector.broadcast %cst_11 : f32 to vector<128x32xf32>
    %14 = arith.maximumf %12, %13 : vector<128x32xf32>
    %c0_12 = arith.constant 0 : index
    %c0_13 = arith.constant 0 : index
    %15 = vector.load %arg6[%c0_12, %c0_13] : memref<32x16xf32, #tpu.memory_space<vmem>>, vector<32x16xf32>
    %cst_14 = arith.constant dense<0.000000e+00> : vector<128x16xf32>
    %16 = tpu.matmul %14, %15, %cst_14 {dimension_numbers = #tpu.dot_dimension_numbers<[1], [0], [0], [1], [0, 0, 1, 1], [], []>} : vector<128x32xf32>, vector<32x16xf32>, vector<128x16xf32> -> vector<128x16xf32>
    %c0_15 = arith.constant 0 : index
    %c0_16 = arith.constant 0 : index
    %17 = vector.load %arg7[%c0_15, %c0_16] : memref<1x16xf32, #tpu.memory_space<vmem>>, vector<1x16xf32>
    %18 = vector.broadcast %17 : vector<1x16xf32> to vector<128x16xf32>
    %19 = arith.addf %16, %18 : vector<128x16xf32>
    %cst_17 = arith.constant 0.000000e+00 : f32
    %20 = vector.broadcast %cst_17 : f32 to vector<128x16xf32>
    %21 = arith.maximumf %19, %20 : vector<128x16xf32>
    %c0_18 = arith.constant 0 : index
    %c0_19 = arith.constant 0 : index
    %22 = vector.load %arg8[%c0_18, %c0_19] : memref<16x1xf32, #tpu.memory_space<vmem>>, vector<16x1xf32>
    %cst_20 = arith.constant dense<0.000000e+00> : vector<128x1xf32>
    %23 = tpu.matmul %21, %22, %cst_20 {dimension_numbers = #tpu.dot_dimension_numbers<[1], [0], [0], [1], [0, 0, 1, 1], [], []>} : vector<128x16xf32>, vector<16x1xf32>, vector<128x1xf32> -> vector<128x1xf32>
    %c0_21 = arith.constant 0 : index
    %c0_22 = arith.constant 0 : index
    %24 = vector.load %arg9[%c0_21, %c0_22] : memref<1x1xf32, #tpu.memory_space<vmem>>, vector<1x1xf32>
    %25 = vector.broadcast %24 : vector<1x1xf32> to vector<128x1xf32>
    %26 = arith.addf %23, %25 : vector<128x1xf32>
    %c0_23 = arith.constant 0 : index
    %c0_24 = arith.constant 0 : index
    %27 = vector.load %arg10[%c0_23, %c0_24] : memref<128x1xf32, #tpu.memory_space<vmem>>, vector<128x1xf32>
    tpu.vector_store %arg10[%c0_23, %c0_24], %26 {strides = array<i32>} : memref<128x1xf32, #tpu.memory_space<vmem>>, vector<128x1xf32>,
    return
  }
  func.func @transform_0(%arg0: i32) -> (i32, i32) {
    %c0_i32 = arith.constant 0 : i32
    %c0_i32_0 = arith.constant 0 : i32
    return %arg0, %c0_i32 : i32, i32
  }
  func.func @transform_1(%arg0: i32) -> (i32, i32) {
    %c0_i32 = arith.constant 0 : i32
    %c0_i32_0 = arith.constant 0 : i32
    %c0_i32_1 = arith.constant 0 : i32
    return %c0_i32, %c0_i32_0 : i32, i32
  }
  func.func @transform_2(%arg0: i32) -> (i32, i32) {
    %c0_i32 = arith.constant 0 : i32
    %c0_i32_0 = arith.constant 0 : i32
    %c0_i32_1 = arith.constant 0 : i32
    return %c0_i32, %c0_i32_0 : i32, i32
  }
  func.func @transform_3(%arg0: i32) -> (i32, i32) {
    %c0_i32 = arith.constant 0 : i32
    %c0_i32_0 = arith.constant 0 : i32
    %c0_i32_1 = arith.constant 0 : i32
    return %c0_i32, %c0_i32_0 : i32, i32
  }
  func.func @transform_4(%arg0: i32) -> (i32, i32) {
    %c0_i32 = arith.constant 0 : i32
    %c0_i32_0 = arith.constant 0 : i32
    %c0_i32_1 = arith.constant 0 : i32
    return %c0_i32, %c0_i32_0 : i32, i32
  }
  func.func @transform_5(%arg0: i32) -> (i32, i32) {
    %c0_i32 = arith.constant 0 : i32
    %c0_i32_0 = arith.constant 0 : i32
    %c0_i32_1 = arith.constant 0 : i32
    return %c0_i32, %c0_i32_0 : i32, i32
  }
  func.func @transform_6(%arg0: i32) -> (i32, i32) {
    %c0_i32 = arith.constant 0 : i32
    %c0_i32_0 = arith.constant 0 : i32
    %c0_i32_1 = arith.constant 0 : i32
    return %c0_i32, %c0_i32_0 : i32, i32
  }
  func.func @transform_7(%arg0: i32) -> (i32, i32) {
    %c0_i32 = arith.constant 0 : i32
    %c0_i32_0 = arith.constant 0 : i32
    %c0_i32_1 = arith.constant 0 : i32
    return %c0_i32, %c0_i32_0 : i32, i32
  }
  func.func @transform_8(%arg0: i32) -> (i32, i32) {
    %c0_i32 = arith.constant 0 : i32
    %c0_i32_0 = arith.constant 0 : i32
    %c0_i32_1 = arith.constant 0 : i32
    return %c0_i32, %c0_i32_0 : i32, i32
  }
  func.func @transform_9(%arg0: i32) -> (i32, i32) {
    %c0_i32 = arith.constant 0 : i32
    %c0_i32_0 = arith.constant 0 : i32
    return %arg0, %c0_i32 : i32, i32
  }
}

</mosaic_0001>

<llo_original>
// kernel: tpu_custom_call.1
$region0: #{tpu_custom_call.1}
  #allocation0 [shape = 'u32[]', space=smem, size = 0x4, offset = 0x4, fixed_abs, tag = 'smem constant byte address 0x4 - core index']
  #allocation1 [shape = 'u32[144,128]{1,0:T(1,128)}', space=vmem, size = 0x12000, scoped, tag = 'internal scratch']
  #allocation2 [shape = 'f32[1,1]{1,0:T(1,128)S(1)}', space=vmem, size = 0x200, scoped, tag = 'scoped memory for tpu_custom_call.1']
  %s0 = inlined_call_operand.vmem [shape: f32[256,3], index: 0, kind: input, shape index: {}]
  %s1 = inlined_call_operand.vmem [shape: f32[3,64], index: 1, kind: input, shape index: {}]
  %s2 = inlined_call_operand.vmem [shape: f32[1,64], index: 2, kind: input, shape index: {}]
  %s3 = inlined_call_operand.vmem [shape: f32[64,32], index: 3, kind: input, shape index: {}]
  %s4 = inlined_call_operand.vmem [shape: f32[1,32], index: 4, kind: input, shape index: {}]
  %s5 = inlined_call_operand.vmem [shape: f32[32,16], index: 5, kind: input, shape index: {}]
  %s6 = inlined_call_operand.vmem [shape: f32[1,16], index: 6, kind: input, shape index: {}]
  %s7 = inlined_call_operand.vmem [shape: f32[16,1], index: 7, kind: input, shape index: {}]
  %s8 = inlined_call_operand.<no memory space> [shape: f32[1,1], index: 8, kind: input, shape index: {}]
  %s9 = inlined_call_operand.vmem [shape: f32[256,1], index: 9, kind: output, shape index: {}]
  %s10 = sld [smem:[#allocation0]]
  $region69: #{tpu_custom_call.1} parent=0
    _
  %s12 = ssub.s32 1, %s10
  %s13 = scalar_select 0, %s12, %s10
  %v14 = vstv %s8
  %15 = vst [vmem:[#allocation2] sm:$0x1] %v14
  loop: start=0, step=1, limit=4
  $region2: #{tpu_custom_call.1} parent=0 // loop_pre_header
    _
  $region3: #{tpu_custom_call.1} parent=0 // loop_header
    %s17 = sphi 0, %s21
    %p18 = scmp.ge.s32.totalorder %s17, 4
    %s27 = sphi 0, %s29
    %s30 = sphi 0, %s27
    %s31 = sphi 0, %s30
    %s47 = sphi 0, %s31
    %s51 = sphi 0, %s51
    %s53 = sphi 0, %s51
    %s54 = sphi 0, %s53
    %s68 = sphi 0, %s54
    %s72 = sphi 0, %s72
    %s74 = sphi 0, %s72
    %s75 = sphi 0, %s74
    %s89 = sphi 0, %s75
    %s93 = sphi 0, %s93
    %s95 = sphi 0, %s93
    %s96 = sphi 0, %s95
    %s110 = sphi 0, %s96
    %s114 = sphi 0, %s114
    %s116 = sphi 0, %s114
    %s117 = sphi 0, %s116
    %s131 = sphi 0, %s117
    %s135 = sphi 0, %s135
    %s137 = sphi 0, %s135
    %s138 = sphi 0, %s137
    %s152 = sphi 0, %s138
    %s156 = sphi 0, %s156
    %s158 = sphi 0, %s156
    %s159 = sphi 0, %s158
    %s173 = sphi 0, %s159
    %s177 = sphi 0, %s177
    %s179 = sphi 0, %s177
    %s180 = sphi 0, %s179
    %s194 = sphi 0, %s180
    %s198 = sphi 0, %s198
    %s200 = sphi 0, %s198
    %s201 = sphi 0, %s200
    %s215 = sphi 0, %s201
    %s221 = sphi 0, %s223
    %s224 = sphi 0, %s221
    %s225 = sphi 0, %s224
    %s241 = sphi 0, %s225
  $region4: #{tpu_custom_call.1} parent=0 // loop_header_branch
    %20 = sbr.rel (%p18) target = $region8
  $region5: #{tpu_custom_call.1} parent=0 // loop_body
    %s22 = ssub.s32 %s17, 1
    %s23 = ssub.s32 %s17, 2
    %s24 = sadd.s32 %s17, 1
    %s25 = ssub.s32 %s17, %s24
    %p26 = scmp.eq.s32.totalorder %s25, 0
    %s28 = sadd.s32 %s27, 1
    %s29 = scalar_select %p26, %s27, %s28
    %p32 = pneg %p26
    %p33 = scmp.eq.s32.totalorder %s17, 1
    %p34 = por %p32, %p33
    %p35 = scmp.ne.s32.totalorder %s27, %s30
    %p36 = scmp.eq.s32.totalorder %s17, 0
    %p37 = por %p35, %p36
    %p38 = scmp.ne.s32.totalorder %s27, %s30
    %p39 = scmp.eq.s32.totalorder %s22, 1
    %p40 = por %p38, %p39
    %p41 = scmp.ne.s32.totalorder %s30, %s31
    %p42 = scmp.eq.s32.totalorder %s22, 0
    %p43 = por %p41, %p42
    %p44 = scmp.ne.s32.totalorder %s30, %s31
    %p45 = scmp.eq.s32.totalorder %s23, 1
    %p46 = por %p44, %p45
    %p48 = scmp.ne.s32.totalorder %s31, %s47
    %p49 = scmp.eq.s32.totalorder %s23, 0
    %p50 = por %p48, %p49
    %s52 = sadd.s32 %s51, 1
    %p55 = scmp.eq.s32.totalorder %s17, 1
    %p56 = scmp.ne.s32.totalorder %s51, %s53
    %p57 = scmp.eq.s32.totalorder %s17, 0
    %p58 = por %p56, %p57
    %p59 = scmp.ne.s32.totalorder %s51, %s53
    %p60 = scmp.eq.s32.totalorder %s22, 1
    %p61 = por %p59, %p60
    %p62 = scmp.ne.s32.totalorder %s53, %s54
    %p63 = scmp.eq.s32.totalorder %s22, 0
    %p64 = por %p62, %p63
    %p65 = scmp.ne.s32.totalorder %s53, %s54
    %p66 = scmp.eq.s32.totalorder %s23, 1
    %p67 = por %p65, %p66
    %p69 = scmp.ne.s32.totalorder %s54, %s68
    %p70 = scmp.eq.s32.totalorder %s23, 0
    %p71 = por %p69, %p70
    %s73 = sadd.s32 %s72, 1
    %p76 = scmp.eq.s32.totalorder %s17, 1
    %p77 = scmp.ne.s32.totalorder %s72, %s74
    %p78 = scmp.eq.s32.totalorder %s17, 0
    %p79 = por %p77, %p78
    %p80 = scmp.ne.s32.totalorder %s72, %s74
    %p81 = scmp.eq.s32.totalorder %s22, 1
    %p82 = por %p80, %p81
    %p83 = scmp.ne.s32.totalorder %s74, %s75
    %p84 = scmp.eq.s32.totalorder %s22, 0
    %p85 = por %p83, %p84
    %p86 = scmp.ne.s32.totalorder %s74, %s75
    %p87 = scmp.eq.s32.totalorder %s23, 1
    %p88 = por %p86, %p87
    %p90 = scmp.ne.s32.totalorder %s75, %s89
    %p91 = scmp.eq.s32.totalorder %s23, 0
    %p92 = por %p90, %p91
    %s94 = sadd.s32 %s93, 1
    %p97 = scmp.eq.s32.totalorder %s17, 1
    %p98 = scmp.ne.s32.totalorder %s93, %s95
    %p99 = scmp.eq.s32.totalorder %s17, 0
    %p100 = por %p98, %p99
    %p101 = scmp.ne.s32.totalorder %s93, %s95
    %p102 = scmp.eq.s32.totalorder %s22, 1
    %p103 = por %p101, %p102
    %p104 = scmp.ne.s32.totalorder %s95, %s96
    %p105 = scmp.eq.s32.totalorder %s22, 0
    %p106 = por %p104, %p105
    %p107 = scmp.ne.s32.totalorder %s95, %s96
    %p108 = scmp.eq.s32.totalorder %s23, 1
    %p109 = por %p107, %p108
    %p111 = scmp.ne.s32.totalorder %s96, %s110
    %p112 = scmp.eq.s32.totalorder %s23, 0
    %p113 = por %p111, %p112
    %s115 = sadd.s32 %s114, 1
    %p118 = scmp.eq.s32.totalorder %s17, 1
    %p119 = scmp.ne.s32.totalorder %s114, %s116
    %p120 = scmp.eq.s32.totalorder %s17, 0
    %p121 = por %p119, %p120
    %p122 = scmp.ne.s32.totalorder %s114, %s116
    %p123 = scmp.eq.s32.totalorder %s22, 1
    %p124 = por %p122, %p123
    %p125 = scmp.ne.s32.totalorder %s116, %s117
    %p126 = scmp.eq.s32.totalorder %s22, 0
    %p127 = por %p125, %p126
    %p128 = scmp.ne.s32.totalorder %s116, %s117
    %p129 = scmp.eq.s32.totalorder %s23, 1
    %p130 = por %p128, %p129
    %p132 = scmp.ne.s32.totalorder %s117, %s131
    %p133 = scmp.eq.s32.totalorder %s23, 0
    %p134 = por %p132, %p133
    %s136 = sadd.s32 %s135, 1
    %p139 = scmp.eq.s32.totalorder %s17, 1
    %p140 = scmp.ne.s32.totalorder %s135, %s137
    %p141 = scmp.eq.s32.totalorder %s17, 0
    %p142 = por %p140, %p141
    %p143 = scmp.ne.s32.totalorder %s135, %s137
    %p144 = scmp.eq.s32.totalorder %s22, 1
    %p145 = por %p143, %p144
    %p146 = scmp.ne.s32.totalorder %s137, %s138
    %p147 = scmp.eq.s32.totalorder %s22, 0
    %p148 = por %p146, %p147
    %p149 = scmp.ne.s32.totalorder %s137, %s138
    %p150 = scmp.eq.s32.totalorder %s23, 1
    %p151 = por %p149, %p150
    %p153 = scmp.ne.s32.totalorder %s138, %s152
    %p154 = scmp.eq.s32.totalorder %s23, 0
    %p155 = por %p153, %p154
    %s157 = sadd.s32 %s156, 1
    %p160 = scmp.eq.s32.totalorder %s17, 1
    %p161 = scmp.ne.s32.totalorder %s156, %s158
    %p162 = scmp.eq.s32.totalorder %s17, 0
    %p163 = por %p161, %p162
    %p164 = scmp.ne.s32.totalorder %s156, %s158
    %p165 = scmp.eq.s32.totalorder %s22, 1
    %p166 = por %p164, %p165
    %p167 = scmp.ne.s32.totalorder %s158, %s159
    %p168 = scmp.eq.s32.totalorder %s22, 0
    %p169 = por %p167, %p168
    %p170 = scmp.ne.s32.totalorder %s158, %s159
    %p171 = scmp.eq.s32.totalorder %s23, 1
    %p172 = por %p170, %p171
    %p174 = scmp.ne.s32.totalorder %s159, %s173
    %p175 = scmp.eq.s32.totalorder %s23, 0
    %p176 = por %p174, %p175
    %s178 = sadd.s32 %s177, 1
    %p181 = scmp.eq.s32.totalorder %s17, 1
    %p182 = scmp.ne.s32.totalorder %s177, %s179
    %p183 = scmp.eq.s32.totalorder %s17, 0
    %p184 = por %p182, %p183
    %p185 = scmp.ne.s32.totalorder %s177, %s179
    %p186 = scmp.eq.s32.totalorder %s22, 1
    %p187 = por %p185, %p186
    %p188 = scmp.ne.s32.totalorder %s179, %s180
    %p189 = scmp.eq.s32.totalorder %s22, 0
    %p190 = por %p188, %p189
    %p191 = scmp.ne.s32.totalorder %s179, %s180
    %p192 = scmp.eq.s32.totalorder %s23, 1
    %p193 = por %p191, %p192
    %p195 = scmp.ne.s32.totalorder %s180, %s194
    %p196 = scmp.eq.s32.totalorder %s23, 0
    %p197 = por %p195, %p196
    %s199 = sadd.s32 %s198, 1
    %p202 = scmp.eq.s32.totalorder %s17, 1
    %p203 = scmp.ne.s32.totalorder %s198, %s200
    %p204 = scmp.eq.s32.totalorder %s17, 0
    %p205 = por %p203, %p204
    %p206 = scmp.ne.s32.totalorder %s198, %s200
    %p207 = scmp.eq.s32.totalorder %s22, 1
    %p208 = por %p206, %p207
    %p209 = scmp.ne.s32.totalorder %s200, %s201
    %p210 = scmp.eq.s32.totalorder %s22, 0
    %p211 = por %p209, %p210
    %p212 = scmp.ne.s32.totalorder %s200, %s201
    %p213 = scmp.eq.s32.totalorder %s23, 1
    %p214 = por %p212, %p213
    %p216 = scmp.ne.s32.totalorder %s201, %s215
    %p217 = scmp.eq.s32.totalorder %s23, 0
    %p218 = por %p216, %p217
    %s219 = ssub.s32 %s17, %s24
    %p220 = scmp.eq.s32.totalorder %s219, 0
    %s222 = sadd.s32 %s221, 1
    %s223 = scalar_select %p220, %s221, %s222
    %p226 = pneg %p220
    %p227 = scmp.eq.s32.totalorder %s17, 1
    %p228 = por %p226, %p227
    %p229 = scmp.ne.s32.totalorder %s221, %s224
    %p230 = scmp.eq.s32.totalorder %s17, 0
    %p231 = por %p229, %p230
    %p232 = scmp.ne.s32.totalorder %s221, %s224
    %p233 = scmp.eq.s32.totalorder %s22, 1
    %p234 = por %p232, %p233
    %p235 = scmp.ne.s32.totalorder %s224, %s225
    %p236 = scmp.eq.s32.totalorder %s22, 0
    %p237 = por %p235, %p236
    %p238 = scmp.ne.s32.totalorder %s224, %s225
    %p239 = scmp.eq.s32.totalorder %s23, 1
    %p240 = por %p238, %p239
    %p242 = scmp.ne.s32.totalorder %s225, %s241
    %p243 = scmp.eq.s32.totalorder %s23, 0
    %p244 = por %p242, %p243
    %p245 = scmp.le.s32.totalorder 1, %s17
    %p246 = scmp.lt.s32.totalorder %s17, 3
    %p247 = pnand %p245, %p246
    %p248 = pneg %p247
    // Predicated region
    $region9: #{tpu_custom_call.1} parent=5 // pred_check
      _
    $region10: #{tpu_custom_call.1} parent=5 // pred_check_branch
      %250 = sbr.rel (%p247) target = $region12
    $region11: #{tpu_custom_call.1} parent=5 // pred_region
      %s251 = ssub.s32 %s17, 1
      // Predicated region
      $region13: #{tpu_custom_call.1} parent=11 // pred_check
        %p252 = pneg %p64
      $region14: #{tpu_custom_call.1} parent=11 // pred_check_branch
        %254 = sbr.rel (%p252) target = $region16
      $region15: #{tpu_custom_call.1} parent=11 // pred_region
        _
      $region16: #{tpu_custom_call.1} parent=11 // pred_fallthru
        _
      // Predicated region
      $region17: #{tpu_custom_call.1} parent=11 // pred_check
        %p255 = pneg %p85
      $region18: #{tpu_custom_call.1} parent=11 // pred_check_branch
        %257 = sbr.rel (%p255) target = $region20
      $region19: #{tpu_custom_call.1} parent=11 // pred_region
        _
      $region20: #{tpu_custom_call.1} parent=11 // pred_fallthru
        _
      // Predicated region
      $region21: #{tpu_custom_call.1} parent=11 // pred_check
        %p258 = pneg %p106
      $region22: #{tpu_custom_call.1} parent=11 // pred_check_branch
        %260 = sbr.rel (%p258) target = $region24
      $region23: #{tpu_custom_call.1} parent=11 // pred_region
        _
      $region24: #{tpu_custom_call.1} parent=11 // pred_fallthru
        _
      // Predicated region
      $region25: #{tpu_custom_call.1} parent=11 // pred_check
        %p261 = pneg %p127
      $region26: #{tpu_custom_call.1} parent=11 // pred_check_branch
        %263 = sbr.rel (%p261) target = $region28
      $region27: #{tpu_custom_call.1} parent=11 // pred_region
        _
      $region28: #{tpu_custom_call.1} parent=11 // pred_fallthru
        _
      // Predicated region
      $region29: #{tpu_custom_call.1} parent=11 // pred_check
        %p264 = pneg %p148
      $region30: #{tpu_custom_call.1} parent=11 // pred_check_branch
        %266 = sbr.rel (%p264) target = $region32
      $region31: #{tpu_custom_call.1} parent=11 // pred_region
        _
      $region32: #{tpu_custom_call.1} parent=11 // pred_fallthru
        _
      // Predicated region
      $region33: #{tpu_custom_call.1} parent=11 // pred_check
        %p267 = pneg %p169
      $region34: #{tpu_custom_call.1} parent=11 // pred_check_branch
        %269 = sbr.rel (%p267) target = $region36
      $region35: #{tpu_custom_call.1} parent=11 // pred_region
        _
      $region36: #{tpu_custom_call.1} parent=11 // pred_fallthru
        _
      // Predicated region
      $region37: #{tpu_custom_call.1} parent=11 // pred_check
        %p270 = pneg %p190
      $region38: #{tpu_custom_call.1} parent=11 // pred_check_branch
        %272 = sbr.rel (%p270) target = $region40
      $region39: #{tpu_custom_call.1} parent=11 // pred_region
        _
      $region40: #{tpu_custom_call.1} parent=11 // pred_fallthru
        _
      // Predicated region
      $region41: #{tpu_custom_call.1} parent=11 // pred_check
        %p273 = pneg %p211
      $region42: #{tpu_custom_call.1} parent=11 // pred_check_branch
        %275 = sbr.rel (%p273) target = $region44
      $region43: #{tpu_custom_call.1} parent=11 // pred_region
        _
      $region44: #{tpu_custom_call.1} parent=11 // pred_fallthru
        _
    $region12: #{tpu_custom_call.1} parent=5 // pred_fallthru
      _
    %p276 = scmp.lt.s32.totalorder %s17, 2
    // Predicated region
    $region45: #{tpu_custom_call.1} parent=5 // pred_check
      %p277 = pneg %p276
    $region46: #{tpu_custom_call.1} parent=5 // pred_check_branch
      %279 = sbr.rel (%p277) target = $region48
    $region47: #{tpu_custom_call.1} parent=5 // pred_region
      // Predicated region
      $region49: #{tpu_custom_call.1} parent=47 // pred_check
        %p280 = pneg %p37
      $region50: #{tpu_custom_call.1} parent=47 // pred_check_branch
        %282 = sbr.rel (%p280) target = $region52
      $region51: #{tpu_custom_call.1} parent=47 // pred_region
        %s283 = smul.u32 16, %s17
        %p284 = scmp.lt.s32.totalorder %s283, 31
        %s285 = scalar_select %p284, %s283, 31
        %s286 = smul.addr %s285, 8
        %s287 = scalar_lea.vmem %s0, %s286
        %s288 = smul.u32 16, %s17
      $region52: #{tpu_custom_call.1} parent=47 // pred_fallthru
        _
    $region48: #{tpu_custom_call.1} parent=5 // pred_fallthru
      _
    %p289 = scmp.le.s32.totalorder 1, %s17
    %p290 = scmp.lt.s32.totalorder %s17, 3
    %p291 = pnand %p289, %p290
    %p292 = pneg %p291
    // Predicated region
    $region53: #{tpu_custom_call.1} parent=5 // pred_check
      _
    $region54: #{tpu_custom_call.1} parent=5 // pred_check_branch
      %294 = sbr.rel (%p291) target = $region56
    $region55: #{tpu_custom_call.1} parent=5 // pred_region
      %s295 = ssub.s32 %s17, 1
      %s296 = smul.u32 16, %s22
      %p297 = scmp.lt.s32.totalorder %s296, 31
      %s298 = scalar_select %p297, %s296, 31
      %s299 = smul.addr %s298, 8
      %s300 = scalar_lea.vmem %s0, %s299
      %p301 = pneg %p43
      %p302 = pneg %p40
      %p303 = pneg %p64
      %p304 = pneg %p61
      %p305 = pneg %p85
      %p306 = pneg %p82
      %p307 = pneg %p106
      %p308 = pneg %p103
      %p309 = pneg %p127
      %p310 = pneg %p124
      %p311 = pneg %p148
      %p312 = pneg %p145
      %p313 = pneg %p169
      %p314 = pneg %p166
      %p315 = pneg %p190
      %p316 = pneg %p187
      %p317 = pneg %p211
      %p318 = pneg %p208
      %p319 = pneg %p237
      %p320 = pneg %p234
      %s321 = smul.u32 16, %s22
      %p322 = scmp.lt.s32.totalorder %s321, 31
      %s323 = scalar_select %p322, %s321, 31
      %s324 = smul.addr %s323, 8
      %s325 = scalar_lea.vmem %s9, %s324
      %s326 = smul.u32 16, %s22
      %p327 = scmp.lt.s32.totalorder %s326, 31
      %s328 = scalar_select %p327, %s326, 31
      %s329 = smul.addr %s328, 8
      %s330 = scalar_lea.vmem %s0, %s329
      %s331 = smul.u32 16, %s22
      %s332 = smul.u32 16, %s22
      %p333 = scmp.lt.s32.totalorder %s332, 31
      %s334 = scalar_select %p333, %s332, 31
      %s335 = smul.addr %s334, 8
      %s336 = scalar_lea.vmem %s9, %s335
      %s337 = smul.u32 16, %s22
      %v338 = vld [vmem:[%s330] sm:$0xff]
      %v339 = vld [vmem:[%s330 + $0x8] sm:$0xff]
      %v340 = vld [vmem:[%s330 + $0x10] sm:$0xff]
      %v341 = vld [vmem:[%s330 + $0x18] sm:$0xff]
      %v342 = vld [vmem:[%s330 + $0x20] sm:$0xff]
      %v343 = vld [vmem:[%s330 + $0x28] sm:$0xff]
      %v344 = vld [vmem:[%s330 + $0x30] sm:$0xff]
      %v345 = vld [vmem:[%s330 + $0x38] sm:$0xff]
      %v346 = vld [vmem:[%s330 + $0x40] sm:$0xff]
      %v347 = vld [vmem:[%s330 + $0x48] sm:$0xff]
      %v348 = vld [vmem:[%s330 + $0x50] sm:$0xff]
      %v349 = vld [vmem:[%s330 + $0x58] sm:$0xff]
      %v350 = vld [vmem:[%s330 + $0x60] sm:$0xff]
      %v351 = vld [vmem:[%s330 + $0x68] sm:$0xff]
      %v352 = vld [vmem:[%s330 + $0x70] sm:$0xff]
      %v353 = vld [vmem:[%s330 + $0x78] sm:$0xff]
      %v354 = vld [vmem:[%s1] sm:$0x7]
      %v355 = vld [vmem:[%s2] sm:$0x1]
      %v357 = vlaneseq
      %v358 = vshrl.u32 %v357, 7
      %v359 = vsub.s32 0, %v358
      %v360 = vrot.slane %v355, %v359
      %vm362 = vcmask 23552
      %v364 = vsel %vm362, %v338, 0
      %v367 = vsel %vm362, %v339, 0
      %v370 = vsel %vm362, %v340, 0
      %v373 = vsel %vm362, %v341, 0
      %v376 = vsel %vm362, %v342, 0
      %v379 = vsel %vm362, %v343, 0
      %v382 = vsel %vm362, %v344, 0
      %v385 = vsel %vm362, %v345, 0
      %v388 = vsel %vm362, %v346, 0
      %v391 = vsel %vm362, %v347, 0
      %v394 = vsel %vm362, %v348, 0
      %v397 = vsel %vm362, %v349, 0
      %v400 = vsel %vm362, %v350, 0
      %v403 = vsel %vm362, %v351, 0
      %v406 = vsel %vm362, %v352, 0
      %v409 = vsel %vm362, %v353, 0
      %vm411 = vcmask 1042432
      %v413 = vsel %vm411, %v354, 0
      %415 = vmatprep.subr.mxu0 0.0
      %416 = vmatpush1.msra.mxu0 %v413
      %417 = vmatprep.subr.mxu0 0.0
      %418 = vmatpush1.msra.mxu0 0.0
      %419 = vmatprep.subr.mxu0 0.0
      %420 = vmatpush1.msra.mxu0 0.0
      %421 = vmatprep.subr.mxu0 0.0
      %422 = vmatpush1.msra.mxu0 0.0
      %423 = vmatprep.subr.mxu0 0.0
      %424 = vmatpush1.msra.mxu0 0.0
      %425 = vmatprep.subr.mxu0 0.0
      %426 = vmatpush1.msra.mxu0 0.0
      %427 = vmatprep.subr.mxu0 0.0
      %428 = vmatpush1.msra.mxu0 0.0
      %429 = vmatprep.subr.mxu0 0.0
      %430 = vmatpush1.msra.mxu0 0.0
      %431 = vmatprep.subr.mxu0 0.0
      %432 = vmatpush1.msra.mxu0 0.0
      %433 = vmatprep.subr.mxu0 0.0
      %434 = vmatpush1.msra.mxu0 0.0
      %435 = vmatprep.subr.mxu0 0.0
      %436 = vmatpush1.msra.mxu0 0.0
      %437 = vmatprep.subr.mxu0 0.0
      %438 = vmatpush1.msra.mxu0 0.0
      %439 = vmatprep.subr.mxu0 0.0
      %440 = vmatpush1.msra.mxu0 0.0
      %441 = vmatprep.subr.mxu0 0.0
      %442 = vmatpush1.msra.mxu0 0.0
      %443 = vmatprep.subr.mxu0 0.0
      %444 = vmatpush1.msra.mxu0 0.0
      %445 = vmatprep.subr.mxu0 0.0
      %446 = vmatpush1.msra.mxu0 0.0
      %447 = vmatprep.subr.mxu0 0.0
      %448 = vmatpush1.msra.mxu0 0.0
      %449 = vmatprep.subr.mxu0 0.0
      %450 = vmatpush1.msra.mxu0 0.0
      %451 = vmatprep.subr.mxu0 0.0
      %452 = vmatpush1.msra.mxu0 0.0
      %453 = vmatprep.subr.mxu0 0.0
      %454 = vmatpush1.msra.mxu0 0.0
      %455 = vmatprep.subr.mxu0 0.0
      %456 = vmatpush1.msra.mxu0 0.0
      %457 = vmatprep.subr.mxu0 0.0
      %458 = vmatpush1.msra.mxu0 0.0
      %459 = vmatprep.subr.mxu0 0.0
      %460 = vmatpush1.msra.mxu0 0.0
      %461 = vmatprep.subr.mxu0 0.0
      %462 = vmatpush1.msra.mxu0 0.0
      %463 = vmatprep.subr.mxu0 0.0
      %464 = vmatpush1.msra.mxu0 0.0
      %465 = vmatprep.subr.mxu0 0.0
      %466 = vmatpush1.msra.mxu0 0.0
      %467 = vmatprep.subr.mxu0 0.0
      %468 = vmatpush1.msra.mxu0 0.0
      %469 = vmatprep.subr.mxu0 0.0
      %470 = vmatpush1.msra.mxu0 0.0
      %471 = vmatprep.subr.mxu0 0.0
      %472 = vmatpush1.msra.mxu0 0.0
      %473 = vmatprep.subr.mxu0 0.0
      %474 = vmatpush1.msra.mxu0 0.0
      %475 = vmatprep.subr.mxu0 0.0
      %476 = vmatpush1.msra.mxu0 0.0
      %477 = vmatprep.subr.mxu0 0.0
      %478 = vmatpush1.msra.mxu0 0.0
      %479 = vmatprep.mubr.f32.mxu0 0.0
      %480 = vmatmul.mubr.f32.gmra.mrb[0].mxu0 %v364
      %v481 = vpop.f32.mrb[0].mxu0
      %v482 = vadd.f32 %v360, %v481
      %v483 = vpop.f32.mrb[0].mxu0
      %484 = vmatprep.mubr.f32.mxu0 0.0
      %485 = vmatmul.mubr.f32.gmra.mrb[0].mxu0 %v367
      %v486 = vpop.f32.mrb[0].mxu0
      %v487 = vadd.f32 %v360, %v486
      %v488 = vpop.f32.mrb[0].mxu0
      %489 = vmatprep.mubr.f32.mxu0 0.0
      %490 = vmatmul.mubr.f32.gmra.mrb[0].mxu0 %v370
      %v491 = vpop.f32.mrb[0].mxu0
      %v492 = vadd.f32 %v360, %v491
      %v493 = vpop.f32.mrb[0].mxu0
      %494 = vmatprep.mubr.f32.mxu0 0.0
      %495 = vmatmul.mubr.f32.gmra.mrb[0].mxu0 %v373
      %v496 = vpop.f32.mrb[0].mxu0
      %v497 = vadd.f32 %v360, %v496
      %v498 = vpop.f32.mrb[0].mxu0
      %499 = vmatprep.mubr.f32.mxu0 0.0
      %500 = vmatmul.mubr.f32.gmra.mrb[0].mxu0 %v376
      %v501 = vpop.f32.mrb[0].mxu0
      %v502 = vadd.f32 %v360, %v501
      %v503 = vpop.f32.mrb[0].mxu0
      %504 = vmatprep.mubr.f32.mxu0 0.0
      %505 = vmatmul.mubr.f32.gmra.mrb[0].mxu0 %v379
      %v506 = vpop.f32.mrb[0].mxu0
      %v507 = vadd.f32 %v360, %v506
      %v508 = vpop.f32.mrb[0].mxu0
      %509 = vmatprep.mubr.f32.mxu0 0.0
      %510 = vmatmul.mubr.f32.gmra.mrb[0].mxu0 %v382
      %v511 = vpop.f32.mrb[0].mxu0
      %v512 = vadd.f32 %v360, %v511
      %v513 = vpop.f32.mrb[0].mxu0
      %514 = vmatprep.mubr.f32.mxu0 0.0
      %515 = vmatmul.mubr.f32.gmra.mrb[0].mxu0 %v385
      %v516 = vpop.f32.mrb[0].mxu0
      %v517 = vadd.f32 %v360, %v516
      %v518 = vpop.f32.mrb[0].mxu0
      %519 = vmatprep.mubr.f32.mxu0 0.0
      %520 = vmatmul.mubr.f32.gmra.mrb[0].mxu0 %v388
      %v521 = vpop.f32.mrb[0].mxu0
      %v522 = vadd.f32 %v360, %v521
      %v523 = vpop.f32.mrb[0].mxu0
      %524 = vmatprep.mubr.f32.mxu0 0.0
      %525 = vmatmul.mubr.f32.gmra.mrb[0].mxu0 %v391
      %v526 = vpop.f32.mrb[0].mxu0
      %v527 = vadd.f32 %v360, %v526
      %v528 = vpop.f32.mrb[0].mxu0
      %529 = vmatprep.mubr.f32.mxu0 0.0
      %530 = vmatmul.mubr.f32.gmra.mrb[0].mxu0 %v394
      %v531 = vpop.f32.mrb[0].mxu0
      %v532 = vadd.f32 %v360, %v531
      %v533 = vpop.f32.mrb[0].mxu0
      %534 = vmatprep.mubr.f32.mxu0 0.0
      %535 = vmatmul.mubr.f32.gmra.mrb[0].mxu0 %v397
      %v536 = vpop.f32.mrb[0].mxu0
      %v537 = vadd.f32 %v360, %v536
      %v538 = vpop.f32.mrb[0].mxu0
      %539 = vmatprep.mubr.f32.mxu0 0.0
      %540 = vmatmul.mubr.f32.gmra.mrb[0].mxu0 %v400
      %v541 = vpop.f32.mrb[0].mxu0
      %v542 = vadd.f32 %v360, %v541
      %v543 = vpop.f32.mrb[0].mxu0
      %544 = vmatprep.mubr.f32.mxu0 0.0
      %545 = vmatmul.mubr.f32.gmra.mrb[0].mxu0 %v403
      %v546 = vpop.f32.mrb[0].mxu0
      %v547 = vadd.f32 %v360, %v546
      %v548 = vpop.f32.mrb[0].mxu0
      %549 = vmatprep.mubr.f32.mxu0 0.0
      %550 = vmatmul.mubr.f32.gmra.mrb[0].mxu0 %v406
      %v551 = vpop.f32.mrb[0].mxu0
      %v552 = vadd.f32 %v360, %v551
      %v553 = vpop.f32.mrb[0].mxu0
      %554 = vmatprep.mubr.f32.mxu0 0.0
      %555 = vmatmul.mubr.f32.gmra.mrb[0].mxu0 %v409
      %v556 = vpop.f32.mrb[0].mxu0
      %v557 = vadd.f32 %v360, %v556
      %v558 = vpop.f32.mrb[0].mxu0
      %559 = vdwg.mxu0
      %v560 = vmax.f32 %v482, 0.0
      %v561 = vmax.f32 %v487, 0.0
      %v562 = vmax.f32 %v492, 0.0
      %v563 = vmax.f32 %v497, 0.0
      %v564 = vmax.f32 %v502, 0.0
      %v565 = vmax.f32 %v507, 0.0
      %v566 = vmax.f32 %v512, 0.0
      %v567 = vmax.f32 %v517, 0.0
      %v568 = vmax.f32 %v522, 0.0
      %v569 = vmax.f32 %v527, 0.0
      %v570 = vmax.f32 %v532, 0.0
      %v571 = vmax.f32 %v537, 0.0
      %v572 = vmax.f32 %v542, 0.0
      %v573 = vmax.f32 %v547, 0.0
      %v574 = vmax.f32 %v552, 0.0
      %v575 = vmax.f32 %v557, 0.0
      %v576 = vld [vmem:[%s3] sm:$0xff]
      %v577 = vld [vmem:[%s3 + $0x8] sm:$0xff]
      %v578 = vld [vmem:[%s3 + $0x10] sm:$0xff]
      %v579 = vld [vmem:[%s3 + $0x18] sm:$0xff]
      %v580 = vld [vmem:[%s3 + $0x20] sm:$0xff]
      %v581 = vld [vmem:[%s3 + $0x28] sm:$0xff]
      %v582 = vld [vmem:[%s3 + $0x30] sm:$0xff]
      %v583 = vld [vmem:[%s3 + $0x38] sm:$0xff]
      %v584 = vld [vmem:[%s4] sm:$0x1]
      %v586 = vlaneseq
      %v587 = vshrl.u32 %v586, 7
      %v588 = vsub.s32 0, %v587
      %v589 = vrot.slane %v584, %v588
      %vm591 = vcmask 523264
      %v593 = vsel %vm591, %v560, 0
      %v596 = vsel %vm591, %v561, 0
      %v599 = vsel %vm591, %v562, 0
      %v602 = vsel %vm591, %v563, 0
      %v605 = vsel %vm591, %v564, 0
      %v608 = vsel %vm591, %v565, 0
      %v611 = vsel %vm591, %v566, 0
      %v614 = vsel %vm591, %v567, 0
      %v617 = vsel %vm591, %v568, 0
      %v620 = vsel %vm591, %v569, 0
      %v623 = vsel %vm591, %v570, 0
      %v626 = vsel %vm591, %v571, 0
      %v629 = vsel %vm591, %v572, 0
      %v632 = vsel %vm591, %v573, 0
      %v635 = vsel %vm591, %v574, 0
      %v638 = vsel %vm591, %v575, 0
      %640 = vmatprep.subr.mxu0 0.0
      %641 = vmatpush1.msra.mxu0 %v576
      %642 = vmatprep.subr.mxu0 0.0
      %643 = vmatpush1.msra.mxu0 %v577
      %644 = vmatprep.subr.mxu0 0.0
      %645 = vmatpush1.msra.mxu0 %v578
      %646 = vmatprep.subr.mxu0 0.0
      %647 = vmatpush1.msra.mxu0 %v579
      %648 = vmatprep.subr.mxu0 0.0
      %649 = vmatpush1.msra.mxu0 %v580
      %650 = vmatprep.subr.mxu0 0.0
      %651 = vmatpush1.msra.mxu0 %v581
      %652 = vmatprep.subr.mxu0 0.0
      %653 = vmatpush1.msra.mxu0 %v582
      %654 = vmatprep.subr.mxu0 0.0
      %655 = vmatpush1.msra.mxu0 %v583
      %656 = vmatprep.subr.mxu0 0.0
      %657 = vmatpush1.msra.mxu0 0.0
      %658 = vmatprep.subr.mxu0 0.0
      %659 = vmatpush1.msra.mxu0 0.0
      %660 = vmatprep.subr.mxu0 0.0
      %661 = vmatpush1.msra.mxu0 0.0
      %662 = vmatprep.subr.mxu0 0.0
      %663 = vmatpush1.msra.mxu0 0.0
      %664 = vmatprep.subr.mxu0 0.0
      %665 = vmatpush1.msra.mxu0 0.0
      %666 = vmatprep.subr.mxu0 0.0
      %667 = vmatpush1.msra.mxu0 0.0
      %668 = vmatprep.subr.mxu0 0.0
      %669 = vmatpush1.msra.mxu0 0.0
      %670 = vmatprep.subr.mxu0 0.0
      %671 = vmatpush1.msra.mxu0 0.0
      %672 = vmatprep.subr.mxu0 0.0
      %673 = vmatpush1.msra.mxu0 0.0
      %674 = vmatprep.subr.mxu0 0.0
      %675 = vmatpush1.msra.mxu0 0.0
      %676 = vmatprep.subr.mxu0 0.0
      %677 = vmatpush1.msra.mxu0 0.0
      %678 = vmatprep.subr.mxu0 0.0
      %679 = vmatpush1.msra.mxu0 0.0
      %680 = vmatprep.subr.mxu0 0.0
      %681 = vmatpush1.msra.mxu0 0.0
      %682 = vmatprep.subr.mxu0 0.0
      %683 = vmatpush1.msra.mxu0 0.0
      %684 = vmatprep.subr.mxu0 0.0
      %685 = vmatpush1.msra.mxu0 0.0
      %686 = vmatprep.subr.mxu0 0.0
      %687 = vmatpush1.msra.mxu0 0.0
      %688 = vmatprep.subr.mxu0 0.0
      %689 = vmatpush1.msra.mxu0 0.0
      %690 = vmatprep.subr.mxu0 0.0
      %691 = vmatpush1.msra.mxu0 0.0
      %692 = vmatprep.subr.mxu0 0.0
      %693 = vmatpush1.msra.mxu0 0.0
      %694 = vmatprep.subr.mxu0 0.0
      %695 = vmatpush1.msra.mxu0 0.0
      %696 = vmatprep.subr.mxu0 0.0
      %697 = vmatpush1.msra.mxu0 0.0
      %698 = vmatprep.subr.mxu0 0.0
      %699 = vmatpush1.msra.mxu0 0.0
      %700 = vmatprep.subr.mxu0 0.0
      %701 = vmatpush1.msra.mxu0 0.0
      %702 = vmatprep.subr.mxu0 0.0
      %703 = vmatpush1.msra.mxu0 0.0
      %704 = vmatprep.mubr.f32.mxu0 0.0
      %705 = vmatmul.mubr.f32.gmra.mrb[0].mxu0 %v593
      %v706 = vpop.f32.mrb[0].mxu0
      %v707 = vadd.f32 %v589, %v706
      %v708 = vpop.f32.mrb[0].mxu0
      %709 = vmatprep.mubr.f32.mxu0 0.0
      %710 = vmatmul.mubr.f32.gmra.mrb[0].mxu0 %v596
      %v711 = vpop.f32.mrb[0].mxu0
      %v712 = vadd.f32 %v589, %v711
      %v713 = vpop.f32.mrb[0].mxu0
      %714 = vmatprep.mubr.f32.mxu0 0.0
      %715 = vmatmul.mubr.f32.gmra.mrb[0].mxu0 %v599
      %v716 = vpop.f32.mrb[0].mxu0
      %v717 = vadd.f32 %v589, %v716
      %v718 = vpop.f32.mrb[0].mxu0
      %719 = vmatprep.mubr.f32.mxu0 0.0
      %720 = vmatmul.mubr.f32.gmra.mrb[0].mxu0 %v602
      %v721 = vpop.f32.mrb[0].mxu0
      %v722 = vadd.f32 %v589, %v721
      %v723 = vpop.f32.mrb[0].mxu0
      %724 = vmatprep.mubr.f32.mxu0 0.0
      %725 = vmatmul.mubr.f32.gmra.mrb[0].mxu0 %v605
      %v726 = vpop.f32.mrb[0].mxu0
      %v727 = vadd.f32 %v589, %v726
      %v728 = vpop.f32.mrb[0].mxu0
      %729 = vmatprep.mubr.f32.mxu0 0.0
      %730 = vmatmul.mubr.f32.gmra.mrb[0].mxu0 %v608
      %v731 = vpop.f32.mrb[0].mxu0
      %v732 = vadd.f32 %v589, %v731
      %v733 = vpop.f32.mrb[0].mxu0
      %734 = vmatprep.mubr.f32.mxu0 0.0
      %735 = vmatmul.mubr.f32.gmra.mrb[0].mxu0 %v611
      %v736 = vpop.f32.mrb[0].mxu0
      %v737 = vadd.f32 %v589, %v736
      %v738 = vpop.f32.mrb[0].mxu0
      %739 = vmatprep.mubr.f32.mxu0 0.0
      %740 = vmatmul.mubr.f32.gmra.mrb[0].mxu0 %v614
      %v741 = vpop.f32.mrb[0].mxu0
      %v742 = vadd.f32 %v589, %v741
      %v743 = vpop.f32.mrb[0].mxu0
      %744 = vmatprep.mubr.f32.mxu0 0.0
      %745 = vmatmul.mubr.f32.gmra.mrb[0].mxu0 %v617
      %v746 = vpop.f32.mrb[0].mxu0
      %v747 = vadd.f32 %v589, %v746
      %v748 = vpop.f32.mrb[0].mxu0
      %749 = vmatprep.mubr.f32.mxu0 0.0
      %750 = vmatmul.mubr.f32.gmra.mrb[0].mxu0 %v620
      %v751 = vpop.f32.mrb[0].mxu0
      %v752 = vadd.f32 %v589, %v751
      %v753 = vpop.f32.mrb[0].mxu0
      %754 = vmatprep.mubr.f32.mxu0 0.0
      %755 = vmatmul.mubr.f32.gmra.mrb[0].mxu0 %v623
      %v756 = vpop.f32.mrb[0].mxu0
      %v757 = vadd.f32 %v589, %v756
      %v758 = vpop.f32.mrb[0].mxu0
      %759 = vmatprep.mubr.f32.mxu0 0.0
      %760 = vmatmul.mubr.f32.gmra.mrb[0].mxu0 %v626
      %v761 = vpop.f32.mrb[0].mxu0
      %v762 = vadd.f32 %v589, %v761
      %v763 = vpop.f32.mrb[0].mxu0
      %764 = vmatprep.mubr.f32.mxu0 0.0
      %765 = vmatmul.mubr.f32.gmra.mrb[0].mxu0 %v629
      %v766 = vpop.f32.mrb[0].mxu0
      %v767 = vadd.f32 %v589, %v766
      %v768 = vpop.f32.mrb[0].mxu0
      %769 = vmatprep.mubr.f32.mxu0 0.0
      %770 = vmatmul.mubr.f32.gmra.mrb[0].mxu0 %v632
      %v771 = vpop.f32.mrb[0].mxu0
      %v772 = vadd.f32 %v589, %v771
      %v773 = vpop.f32.mrb[0].mxu0
      %774 = vmatprep.mubr.f32.mxu0 0.0
      %775 = vmatmul.mubr.f32.gmra.mrb[0].mxu0 %v635
      %v776 = vpop.f32.mrb[0].mxu0
      %v777 = vadd.f32 %v589, %v776
      %v778 = vpop.f32.mrb[0].mxu0
      %779 = vmatprep.mubr.f32.mxu0 0.0
      %780 = vmatmul.mubr.f32.gmra.mrb[0].mxu0 %v638
      %v781 = vpop.f32.mrb[0].mxu0
      %v782 = vadd.f32 %v589, %v781
      %v783 = vpop.f32.mrb[0].mxu0
      %784 = vdwg.mxu0
      %v785 = vmax.f32 %v707, 0.0
      %v786 = vmax.f32 %v712, 0.0
      %v787 = vmax.f32 %v717, 0.0
      %v788 = vmax.f32 %v722, 0.0
      %v789 = vmax.f32 %v727, 0.0
      %v790 = vmax.f32 %v732, 0.0
      %v791 = vmax.f32 %v737, 0.0
      %v792 = vmax.f32 %v742, 0.0
      %v793 = vmax.f32 %v747, 0.0
      %v794 = vmax.f32 %v752, 0.0
      %v795 = vmax.f32 %v757, 0.0
      %v796 = vmax.f32 %v762, 0.0
      %v797 = vmax.f32 %v767, 0.0
      %v798 = vmax.f32 %v772, 0.0
      %v799 = vmax.f32 %v777, 0.0
      %v800 = vmax.f32 %v782, 0.0
      %v801 = vld [vmem:[%s5] sm:$0xff]
      %v802 = vld [vmem:[%s5 + $0x8] sm:$0xff]
      %v803 = vld [vmem:[%s5 + $0x10] sm:$0xff]
      %v804 = vld [vmem:[%s5 + $0x18] sm:$0xff]
      %v805 = vld [vmem:[%s6] sm:$0x1]
      %v807 = vlaneseq
      %v808 = vshrl.u32 %v807, 7
      %v809 = vsub.s32 0, %v808
      %v810 = vrot.slane %v805, %v809
      %vm812 = vcmask 261120
      %v814 = vsel %vm812, %v785, 0
      %v817 = vsel %vm812, %v786, 0
      %v820 = vsel %vm812, %v787, 0
      %v823 = vsel %vm812, %v788, 0
      %v826 = vsel %vm812, %v789, 0
      %v829 = vsel %vm812, %v790, 0
      %v832 = vsel %vm812, %v791, 0
      %v835 = vsel %vm812, %v792, 0
      %v838 = vsel %vm812, %v793, 0
      %v841 = vsel %vm812, %v794, 0
      %v844 = vsel %vm812, %v795, 0
      %v847 = vsel %vm812, %v796, 0
      %v850 = vsel %vm812, %v797, 0
      %v853 = vsel %vm812, %v798, 0
      %v856 = vsel %vm812, %v799, 0
      %v859 = vsel %vm812, %v800, 0
      %861 = vmatprep.subr.mxu0 0.0
      %862 = vmatpush1.msra.mxu0 %v801
      %863 = vmatprep.subr.mxu0 0.0
      %864 = vmatpush1.msra.mxu0 %v802
      %865 = vmatprep.subr.mxu0 0.0
      %866 = vmatpush1.msra.mxu0 %v803
      %867 = vmatprep.subr.mxu0 0.0
      %868 = vmatpush1.msra.mxu0 %v804
      %869 = vmatprep.subr.mxu0 0.0
      %870 = vmatpush1.msra.mxu0 0.0
      %871 = vmatprep.subr.mxu0 0.0
      %872 = vmatpush1.msra.mxu0 0.0
      %873 = vmatprep.subr.mxu0 0.0
      %874 = vmatpush1.msra.mxu0 0.0
      %875 = vmatprep.subr.mxu0 0.0
      %876 = vmatpush1.msra.mxu0 0.0
      %877 = vmatprep.subr.mxu0 0.0
      %878 = vmatpush1.msra.mxu0 0.0
      %879 = vmatprep.subr.mxu0 0.0
      %880 = vmatpush1.msra.mxu0 0.0
      %881 = vmatprep.subr.mxu0 0.0
      %882 = vmatpush1.msra.mxu0 0.0
      %883 = vmatprep.subr.mxu0 0.0
      %884 = vmatpush1.msra.mxu0 0.0
      %885 = vmatprep.subr.mxu0 0.0
      %886 = vmatpush1.msra.mxu0 0.0
      %887 = vmatprep.subr.mxu0 0.0
      %888 = vmatpush1.msra.mxu0 0.0
      %889 = vmatprep.subr.mxu0 0.0
      %890 = vmatpush1.msra.mxu0 0.0
      %891 = vmatprep.subr.mxu0 0.0
      %892 = vmatpush1.msra.mxu0 0.0
      %893 = vmatprep.subr.mxu0 0.0
      %894 = vmatpush1.msra.mxu0 0.0
      %895 = vmatprep.subr.mxu0 0.0
      %896 = vmatpush1.msra.mxu0 0.0
      %897 = vmatprep.subr.mxu0 0.0
      %898 = vmatpush1.msra.mxu0 0.0
      %899 = vmatprep.subr.mxu0 0.0
      %900 = vmatpush1.msra.mxu0 0.0
      %901 = vmatprep.subr.mxu0 0.0
      %902 = vmatpush1.msra.mxu0 0.0
      %903 = vmatprep.subr.mxu0 0.0
      %904 = vmatpush1.msra.mxu0 0.0
      %905 = vmatprep.subr.mxu0 0.0
      %906 = vmatpush1.msra.mxu0 0.0
      %907 = vmatprep.subr.mxu0 0.0
      %908 = vmatpush1.msra.mxu0 0.0
      %909 = vmatprep.subr.mxu0 0.0
      %910 = vmatpush1.msra.mxu0 0.0
      %911 = vmatprep.subr.mxu0 0.0
      %912 = vmatpush1.msra.mxu0 0.0
      %913 = vmatprep.subr.mxu0 0.0
      %914 = vmatpush1.msra.mxu0 0.0
      %915 = vmatprep.subr.mxu0 0.0
      %916 = vmatpush1.msra.mxu0 0.0
      %917 = vmatprep.subr.mxu0 0.0
      %918 = vmatpush1.msra.mxu0 0.0
      %919 = vmatprep.subr.mxu0 0.0
      %920 = vmatpush1.msra.mxu0 0.0
      %921 = vmatprep.subr.mxu0 0.0
      %922 = vmatpush1.msra.mxu0 0.0
      %923 = vmatprep.subr.mxu0 0.0
      %924 = vmatpush1.msra.mxu0 0.0
      %925 = vmatprep.mubr.f32.mxu0 0.0
      %926 = vmatmul.mubr.f32.gmra.mrb[0].mxu0 %v814
      %v927 = vpop.f32.mrb[0].mxu0
      %v928 = vadd.f32 %v810, %v927
      %v929 = vpop.f32.mrb[0].mxu0
      %930 = vmatprep.mubr.f32.mxu0 0.0
      %931 = vmatmul.mubr.f32.gmra.mrb[0].mxu0 %v817
      %v932 = vpop.f32.mrb[0].mxu0
      %v933 = vadd.f32 %v810, %v932
      %v934 = vpop.f32.mrb[0].mxu0
      %935 = vmatprep.mubr.f32.mxu0 0.0
      %936 = vmatmul.mubr.f32.gmra.mrb[0].mxu0 %v820
      %v937 = vpop.f32.mrb[0].mxu0
      %v938 = vadd.f32 %v810, %v937
      %v939 = vpop.f32.mrb[0].mxu0
      %940 = vmatprep.mubr.f32.mxu0 0.0
      %941 = vmatmul.mubr.f32.gmra.mrb[0].mxu0 %v823
      %v942 = vpop.f32.mrb[0].mxu0
      %v943 = vadd.f32 %v810, %v942
      %v944 = vpop.f32.mrb[0].mxu0
      %945 = vmatprep.mubr.f32.mxu0 0.0
      %946 = vmatmul.mubr.f32.gmra.mrb[0].mxu0 %v826
      %v947 = vpop.f32.mrb[0].mxu0
      %v948 = vadd.f32 %v810, %v947
      %v949 = vpop.f32.mrb[0].mxu0
      %950 = vmatprep.mubr.f32.mxu0 0.0
      %951 = vmatmul.mubr.f32.gmra.mrb[0].mxu0 %v829
      %v952 = vpop.f32.mrb[0].mxu0
      %v953 = vadd.f32 %v810, %v952
      %v954 = vpop.f32.mrb[0].mxu0
      %955 = vmatprep.mubr.f32.mxu0 0.0
      %956 = vmatmul.mubr.f32.gmra.mrb[0].mxu0 %v832
      %v957 = vpop.f32.mrb[0].mxu0
      %v958 = vadd.f32 %v810, %v957
      %v959 = vpop.f32.mrb[0].mxu0
      %960 = vmatprep.mubr.f32.mxu0 0.0
      %961 = vmatmul.mubr.f32.gmra.mrb[0].mxu0 %v835
      %v962 = vpop.f32.mrb[0].mxu0
      %v963 = vadd.f32 %v810, %v962
      %v964 = vpop.f32.mrb[0].mxu0
      %965 = vmatprep.mubr.f32.mxu0 0.0
      %966 = vmatmul.mubr.f32.gmra.mrb[0].mxu0 %v838
      %v967 = vpop.f32.mrb[0].mxu0
      %v968 = vadd.f32 %v810, %v967
      %v969 = vpop.f32.mrb[0].mxu0
      %970 = vmatprep.mubr.f32.mxu0 0.0
      %971 = vmatmul.mubr.f32.gmra.mrb[0].mxu0 %v841
      %v972 = vpop.f32.mrb[0].mxu0
      %v973 = vadd.f32 %v810, %v972
      %v974 = vpop.f32.mrb[0].mxu0
      %975 = vmatprep.mubr.f32.mxu0 0.0
      %976 = vmatmul.mubr.f32.gmra.mrb[0].mxu0 %v844
      %v977 = vpop.f32.mrb[0].mxu0
      %v978 = vadd.f32 %v810, %v977
      %v979 = vpop.f32.mrb[0].mxu0
      %980 = vmatprep.mubr.f32.mxu0 0.0
      %981 = vmatmul.mubr.f32.gmra.mrb[0].mxu0 %v847
      %v982 = vpop.f32.mrb[0].mxu0
      %v983 = vadd.f32 %v810, %v982
      %v984 = vpop.f32.mrb[0].mxu0
      %985 = vmatprep.mubr.f32.mxu0 0.0
      %986 = vmatmul.mubr.f32.gmra.mrb[0].mxu0 %v850
      %v987 = vpop.f32.mrb[0].mxu0
      %v988 = vadd.f32 %v810, %v987
      %v989 = vpop.f32.mrb[0].mxu0
      %990 = vmatprep.mubr.f32.mxu0 0.0
      %991 = vmatmul.mubr.f32.gmra.mrb[0].mxu0 %v853
      %v992 = vpop.f32.mrb[0].mxu0
      %v993 = vadd.f32 %v810, %v992
      %v994 = vpop.f32.mrb[0].mxu0
      %995 = vmatprep.mubr.f32.mxu0 0.0
      %996 = vmatmul.mubr.f32.gmra.mrb[0].mxu0 %v856
      %v997 = vpop.f32.mrb[0].mxu0
      %v998 = vadd.f32 %v810, %v997
      %v999 = vpop.f32.mrb[0].mxu0
      %1000 = vmatprep.mubr.f32.mxu0 0.0
      %1001 = vmatmul.mubr.f32.gmra.mrb[0].mxu0 %v859
      %v1002 = vpop.f32.mrb[0].mxu0
      %v1003 = vadd.f32 %v810, %v1002
      %v1004 = vpop.f32.mrb[0].mxu0
      %1005 = vdwg.mxu0
      %v1006 = vmax.f32 %v928, 0.0
      %v1007 = vmax.f32 %v933, 0.0
      %v1008 = vmax.f32 %v938, 0.0
      %v1009 = vmax.f32 %v943, 0.0
      %v1010 = vmax.f32 %v948, 0.0
      %v1011 = vmax.f32 %v953, 0.0
      %v1012 = vmax.f32 %v958, 0.0
      %v1013 = vmax.f32 %v963, 0.0
      %v1014 = vmax.f32 %v968, 0.0
      %v1015 = vmax.f32 %v973, 0.0
      %v1016 = vmax.f32 %v978, 0.0
      %v1017 = vmax.f32 %v983, 0.0
      %v1018 = vmax.f32 %v988, 0.0
      %v1019 = vmax.f32 %v993, 0.0
      %v1020 = vmax.f32 %v998, 0.0
      %v1021 = vmax.f32 %v1003, 0.0
      %v1022 = vld [vmem:[%s7] sm:$0xff]
      %v1023 = vld [vmem:[%s7 + $0x8] sm:$0xff]
      %v1024 = vld [vmem:[#allocation2] sm:$0x1]
      %v1026 = vlaneseq
      %v1027 = vshrl.u32 %v1026, 7
      %v1028 = vsub.s32 0, %v1027
      %v1029 = vrot.slane %v1024, %v1028
      %vm1031 = vcmask 130048
      %v1033 = vsel %vm1031, %v1006, 0
      %v1036 = vsel %vm1031, %v1007, 0
      %v1039 = vsel %vm1031, %v1008, 0
      %v1042 = vsel %vm1031, %v1009, 0
      %v1045 = vsel %vm1031, %v1010, 0
      %v1048 = vsel %vm1031, %v1011, 0
      %v1051 = vsel %vm1031, %v1012, 0
      %v1054 = vsel %vm1031, %v1013, 0
      %v1057 = vsel %vm1031, %v1014, 0
      %v1060 = vsel %vm1031, %v1015, 0
      %v1063 = vsel %vm1031, %v1016, 0
      %v1066 = vsel %vm1031, %v1017, 0
      %v1069 = vsel %vm1031, %v1018, 0
      %v1072 = vsel %vm1031, %v1019, 0
      %v1075 = vsel %vm1031, %v1020, 0
      %v1078 = vsel %vm1031, %v1021, 0
      %1080 = vmatprep.subr.mxu0 0.0
      %1081 = vmatpush1.msra.mxu0 %v1022
      %1082 = vmatprep.subr.mxu0 0.0
      %1083 = vmatpush1.msra.mxu0 %v1023
      %1084 = vmatprep.subr.mxu0 0.0
      %1085 = vmatpush1.msra.mxu0 0.0
      %1086 = vmatprep.subr.mxu0 0.0
      %1087 = vmatpush1.msra.mxu0 0.0
      %1088 = vmatprep.subr.mxu0 0.0
      %1089 = vmatpush1.msra.mxu0 0.0
      %1090 = vmatprep.subr.mxu0 0.0
      %1091 = vmatpush1.msra.mxu0 0.0
      %1092 = vmatprep.subr.mxu0 0.0
      %1093 = vmatpush1.msra.mxu0 0.0
      %1094 = vmatprep.subr.mxu0 0.0
      %1095 = vmatpush1.msra.mxu0 0.0
      %1096 = vmatprep.subr.mxu0 0.0
      %1097 = vmatpush1.msra.mxu0 0.0
      %1098 = vmatprep.subr.mxu0 0.0
      %1099 = vmatpush1.msra.mxu0 0.0
      %1100 = vmatprep.subr.mxu0 0.0
      %1101 = vmatpush1.msra.mxu0 0.0
      %1102 = vmatprep.subr.mxu0 0.0
      %1103 = vmatpush1.msra.mxu0 0.0
      %1104 = vmatprep.subr.mxu0 0.0
      %1105 = vmatpush1.msra.mxu0 0.0
      %1106 = vmatprep.subr.mxu0 0.0
      %1107 = vmatpush1.msra.mxu0 0.0
      %1108 = vmatprep.subr.mxu0 0.0
      %1109 = vmatpush1.msra.mxu0 0.0
      %1110 = vmatprep.subr.mxu0 0.0
      %1111 = vmatpush1.msra.mxu0 0.0
      %1112 = vmatprep.subr.mxu0 0.0
      %1113 = vmatpush1.msra.mxu0 0.0
      %1114 = vmatprep.subr.mxu0 0.0
      %1115 = vmatpush1.msra.mxu0 0.0
      %1116 = vmatprep.subr.mxu0 0.0
      %1117 = vmatpush1.msra.mxu0 0.0
      %1118 = vmatprep.subr.mxu0 0.0
      %1119 = vmatpush1.msra.mxu0 0.0
      %1120 = vmatprep.subr.mxu0 0.0
      %1121 = vmatpush1.msra.mxu0 0.0
      %1122 = vmatprep.subr.mxu0 0.0
      %1123 = vmatpush1.msra.mxu0 0.0
      %1124 = vmatprep.subr.mxu0 0.0
      %1125 = vmatpush1.msra.mxu0 0.0
      %1126 = vmatprep.subr.mxu0 0.0
      %1127 = vmatpush1.msra.mxu0 0.0
      %1128 = vmatprep.subr.mxu0 0.0
      %1129 = vmatpush1.msra.mxu0 0.0
      %1130 = vmatprep.subr.mxu0 0.0
      %1131 = vmatpush1.msra.mxu0 0.0
      %1132 = vmatprep.subr.mxu0 0.0
      %1133 = vmatpush1.msra.mxu0 0.0
      %1134 = vmatprep.subr.mxu0 0.0
      %1135 = vmatpush1.msra.mxu0 0.0
      %1136 = vmatprep.subr.mxu0 0.0
      %1137 = vmatpush1.msra.mxu0 0.0
      %1138 = vmatprep.subr.mxu0 0.0
      %1139 = vmatpush1.msra.mxu0 0.0
      %1140 = vmatprep.subr.mxu0 0.0
      %1141 = vmatpush1.msra.mxu0 0.0
      %1142 = vmatprep.subr.mxu0 0.0
      %1143 = vmatpush1.msra.mxu0 0.0
      %1144 = vmatprep.mubr.f32.mxu0 0.0
      %1145 = vmatmul.mubr.f32.gmra.mrb[0].mxu0 %v1033
      %v1146 = vpop.f32.mrb[0].mxu0
      %v1147 = vadd.f32 %v1029, %v1146
      %v1148 = vpop.f32.mrb[0].mxu0
      %1149 = vmatprep.mubr.f32.mxu0 0.0
      %1150 = vmatmul.mubr.f32.gmra.mrb[0].mxu0 %v1036
      %v1151 = vpop.f32.mrb[0].mxu0
      %v1152 = vadd.f32 %v1029, %v1151
      %v1153 = vpop.f32.mrb[0].mxu0
      %1154 = vmatprep.mubr.f32.mxu0 0.0
      %1155 = vmatmul.mubr.f32.gmra.mrb[0].mxu0 %v1039
      %v1156 = vpop.f32.mrb[0].mxu0
      %v1157 = vadd.f32 %v1029, %v1156
      %v1158 = vpop.f32.mrb[0].mxu0
      %1159 = vmatprep.mubr.f32.mxu0 0.0
      %1160 = vmatmul.mubr.f32.gmra.mrb[0].mxu0 %v1042
      %v1161 = vpop.f32.mrb[0].mxu0
      %v1162 = vadd.f32 %v1029, %v1161
      %v1163 = vpop.f32.mrb[0].mxu0
      %1164 = vmatprep.mubr.f32.mxu0 0.0
      %1165 = vmatmul.mubr.f32.gmra.mrb[0].mxu0 %v1045
      %v1166 = vpop.f32.mrb[0].mxu0
      %v1167 = vadd.f32 %v1029, %v1166
      %v1168 = vpop.f32.mrb[0].mxu0
      %1169 = vmatprep.mubr.f32.mxu0 0.0
      %1170 = vmatmul.mubr.f32.gmra.mrb[0].mxu0 %v1048
      %v1171 = vpop.f32.mrb[0].mxu0
      %v1172 = vadd.f32 %v1029, %v1171
      %v1173 = vpop.f32.mrb[0].mxu0
      %1174 = vmatprep.mubr.f32.mxu0 0.0
      %1175 = vmatmul.mubr.f32.gmra.mrb[0].mxu0 %v1051
      %v1176 = vpop.f32.mrb[0].mxu0
      %v1177 = vadd.f32 %v1029, %v1176
      %v1178 = vpop.f32.mrb[0].mxu0
      %1179 = vmatprep.mubr.f32.mxu0 0.0
      %1180 = vmatmul.mubr.f32.gmra.mrb[0].mxu0 %v1054
      %v1181 = vpop.f32.mrb[0].mxu0
      %v1182 = vadd.f32 %v1029, %v1181
      %v1183 = vpop.f32.mrb[0].mxu0
      %1184 = vmatprep.mubr.f32.mxu0 0.0
      %1185 = vmatmul.mubr.f32.gmra.mrb[0].mxu0 %v1057
      %v1186 = vpop.f32.mrb[0].mxu0
      %v1187 = vadd.f32 %v1029, %v1186
      %v1188 = vpop.f32.mrb[0].mxu0
      %1189 = vmatprep.mubr.f32.mxu0 0.0
      %1190 = vmatmul.mubr.f32.gmra.mrb[0].mxu0 %v1060
      %v1191 = vpop.f32.mrb[0].mxu0
      %v1192 = vadd.f32 %v1029, %v1191
      %v1193 = vpop.f32.mrb[0].mxu0
      %1194 = vmatprep.mubr.f32.mxu0 0.0
      %1195 = vmatmul.mubr.f32.gmra.mrb[0].mxu0 %v1063
      %v1196 = vpop.f32.mrb[0].mxu0
      %v1197 = vadd.f32 %v1029, %v1196
      %v1198 = vpop.f32.mrb[0].mxu0
      %1199 = vmatprep.mubr.f32.mxu0 0.0
      %1200 = vmatmul.mubr.f32.gmra.mrb[0].mxu0 %v1066
      %v1201 = vpop.f32.mrb[0].mxu0
      %v1202 = vadd.f32 %v1029, %v1201
      %v1203 = vpop.f32.mrb[0].mxu0
      %1204 = vmatprep.mubr.f32.mxu0 0.0
      %1205 = vmatmul.mubr.f32.gmra.mrb[0].mxu0 %v1069
      %v1206 = vpop.f32.mrb[0].mxu0
      %v1207 = vadd.f32 %v1029, %v1206
      %v1208 = vpop.f32.mrb[0].mxu0
      %1209 = vmatprep.mubr.f32.mxu0 0.0
      %1210 = vmatmul.mubr.f32.gmra.mrb[0].mxu0 %v1072
      %v1211 = vpop.f32.mrb[0].mxu0
      %v1212 = vadd.f32 %v1029, %v1211
      %v1213 = vpop.f32.mrb[0].mxu0
      %1214 = vmatprep.mubr.f32.mxu0 0.0
      %1215 = vmatmul.mubr.f32.gmra.mrb[0].mxu0 %v1075
      %v1216 = vpop.f32.mrb[0].mxu0
      %v1217 = vadd.f32 %v1029, %v1216
      %v1218 = vpop.f32.mrb[0].mxu0
      %1219 = vmatprep.mubr.f32.mxu0 0.0
      %1220 = vmatmul.mubr.f32.gmra.mrb[0].mxu0 %v1078
      %v1221 = vpop.f32.mrb[0].mxu0
      %v1222 = vadd.f32 %v1029, %v1221
      %v1223 = vpop.f32.mrb[0].mxu0
      %1224 = vdwg.mxu0
      %vm1225 = vcmask 7168
      %1226 = vst.msk [vmem:[%s336] sm:$0xff] %vm1225, %v1147
      %1227 = vst.msk [vmem:[%s336 + $0x8] sm:$0xff] %vm1225, %v1152
      %1228 = vst.msk [vmem:[%s336 + $0x10] sm:$0xff] %vm1225, %v1157
      %1229 = vst.msk [vmem:[%s336 + $0x18] sm:$0xff] %vm1225, %v1162
      %1230 = vst.msk [vmem:[%s336 + $0x20] sm:$0xff] %vm1225, %v1167
      %1231 = vst.msk [vmem:[%s336 + $0x28] sm:$0xff] %vm1225, %v1172
      %1232 = vst.msk [vmem:[%s336 + $0x30] sm:$0xff] %vm1225, %v1177
      %1233 = vst.msk [vmem:[%s336 + $0x38] sm:$0xff] %vm1225, %v1182
      %1234 = vst.msk [vmem:[%s336 + $0x40] sm:$0xff] %vm1225, %v1187
      %1235 = vst.msk [vmem:[%s336 + $0x48] sm:$0xff] %vm1225, %v1192
      %1236 = vst.msk [vmem:[%s336 + $0x50] sm:$0xff] %vm1225, %v1197
      %1237 = vst.msk [vmem:[%s336 + $0x58] sm:$0xff] %vm1225, %v1202
      %1238 = vst.msk [vmem:[%s336 + $0x60] sm:$0xff] %vm1225, %v1207
      %1239 = vst.msk [vmem:[%s336 + $0x68] sm:$0xff] %vm1225, %v1212
      %1240 = vst.msk [vmem:[%s336 + $0x70] sm:$0xff] %vm1225, %v1217
      %1241 = vst.msk [vmem:[%s336 + $0x78] sm:$0xff] %vm1225, %v1222
      %s1242 = smul.u32 16, %s22
      %p1243 = scmp.lt.s32.totalorder %s1242, 31
      %s1244 = scalar_select %p1243, %s1242, 31
      %s1245 = smul.addr %s1244, 8
      %s1246 = scalar_lea.vmem %s9, %s1245
      // Predicated region
      $region57: #{tpu_custom_call.1} parent=55 // pred_check
        %p1247 = pneg %p234
      $region58: #{tpu_custom_call.1} parent=55 // pred_check_branch
        %1249 = sbr.rel (%p1247) target = $region60
      $region59: #{tpu_custom_call.1} parent=55 // pred_region
        %s1250 = smul.u32 16, %s22
      $region60: #{tpu_custom_call.1} parent=55 // pred_fallthru
        _
    $region56: #{tpu_custom_call.1} parent=5 // pred_fallthru
      _
    %p1251 = scmp.le.s32.totalorder 2, %s17
    // Predicated region
    $region61: #{tpu_custom_call.1} parent=5 // pred_check
      %p1252 = pneg %p1251
    $region62: #{tpu_custom_call.1} parent=5 // pred_check_branch
      %1254 = sbr.rel (%p1252) target = $region64
    $region63: #{tpu_custom_call.1} parent=5 // pred_region
      %s1255 = ssub.s32 %s17, 2
      // Predicated region
      $region65: #{tpu_custom_call.1} parent=63 // pred_check
        %p1256 = pneg %p240
      $region66: #{tpu_custom_call.1} parent=63 // pred_check_branch
        %1258 = sbr.rel (%p1256) target = $region68
      $region67: #{tpu_custom_call.1} parent=63 // pred_region
        %s1259 = smul.u32 16, %s23
        %p1260 = scmp.lt.s32.totalorder %s1259, 31
        %s1261 = scalar_select %p1260, %s1259, 31
        %s1262 = smul.addr %s1261, 8
        %s1263 = scalar_lea.vmem %s9, %s1262
      $region68: #{tpu_custom_call.1} parent=63 // pred_fallthru
        _
    $region64: #{tpu_custom_call.1} parent=5 // pred_fallthru
      _
  $region6: #{tpu_custom_call.1} parent=0 // loop_footer
    %s21 = sadd.s32 1, %s17
  $region7: #{tpu_custom_call.1} parent=0 // loop_footer_branch
    %16 = sbr.rel target = $region3
  $region8: #{tpu_custom_call.1} parent=0 // loop_exit
    _

</llo_original>
